<compile_context>
chip_gen: v6e
topology: v6e:2x2x1
jax: 0.10.0
libtpu: 0.0.40
codegen_flags: <defaults>
</compile_context>

<pallas_src>
import functools

import jax
import jax.numpy as jnp
from jax import lax
from jax.experimental import pallas as pl
from jax.experimental.pallas import tpu as pltpu

LANE = 128
SUBLANE = 8


def _round_up(x, m):
    return ((x + m - 1) // m) * m


# ---------------------------------------------------------------------------
# Pallas kernel: one time-chunk per grid iteration
# ---------------------------------------------------------------------------
def _lstm_chunk_kernel(
    x_ref,        # (Tc, I)      input chunk (streamed per grid step)
    h0_ref,       # (1, Hp)      initial hidden state (lane padded)
    c0_ref,       # (1, Hp)      initial memory state (lane padded)
    wx_ref,       # (I, 4*Hp)    fused input->gates weights  [i | f | o | g]
    wh_ref,       # (Hp, 4*Hp)   fused hidden->gates weights [i | f | o | g]
    b_ref,        # (1, 4*Hp)    fused gate bias (f32)
    why_ref,      # (Hp, O_pad)  output projection
    by_ref,       # (1, O_pad)   output bias (f32)
    out_ref,      # (Tc, O_pad)  output chunk
    hfin_ref,     # (1, Hp)      final hidden state
    cfin_ref,     # (1, Hp)      final memory state
    h_state,      # VMEM (1, Hp) carried hidden state
    c_state,      # VMEM (1, Hp) carried memory state
    gx_buf,       # VMEM (Tc, 4*Hp) hoisted input projection
    h_buf,        # VMEM (Tc, Hp)   per-step hidden rows for deferred out-proj
    *,
    seq_len,      # true (unpadded) sequence length
    chunk,        # Tc
    hidden_pad,   # Hp
):
    n = pl.program_id(0)
    Hp = hidden_pad

    # Initialize the VMEM-resident carry from the provided initial state.
    @pl.when(n == 0)
    def _():
        h_state[...] = h0_ref[...]
        c_state[...] = c0_ref[...]

    # ---- Phase 1: hoisted input projection for the whole chunk ------------
    # One well-shaped (Tc, I) x (I, 4*Hp) MXU matmul + f32 bias add.
    gx_buf[...] = (
        jnp.dot(x_ref[...].astype(wx_ref.dtype), wx_ref[...],
                preferred_element_type=jnp.float32)
        + b_ref[...]
    )

    # ---- Phase 2: recurrence over the chunk --------------------------------
    # Per step: one (1, Hp) x (Hp, 4*Hp) matmul + vreg-aligned gate math.
    def step(t, carry):
        h, c = carry
        gates = gx_buf[pl.ds(t, 1), :] + jnp.dot(
            h.astype(wh_ref.dtype), wh_ref[...],
            preferred_element_type=jnp.float32)

        i_g = jax.nn.sigmoid(gates[:, 0 * Hp:1 * Hp])
        f_g = jax.nn.sigmoid(gates[:, 1 * Hp:2 * Hp])
        o_g = jax.nn.sigmoid(gates[:, 2 * Hp:3 * Hp])
        g = jnp.tanh(gates[:, 3 * Hp:4 * Hp])

        c_new = f_g * c + i_g * g
        h_new = o_g * jnp.tanh(c_new)

        # Freeze the state on padded tail timesteps so final h/c are exact.
        valid = (n * chunk + t) < seq_len
        h_new = jnp.where(valid, h_new, h)
        c_new = jnp.where(valid, c_new, c)

        h_buf[pl.ds(t, 1), :] = h_new   # lane-dense vst, no MXU on this path
        return (h_new, c_new)

    h_last, c_last = lax.fori_loop(0, chunk, step,
                                   (h_state[...], c_state[...]))
    h_state[...] = h_last
    c_state[...] = c_last

    # ---- Phase 3: deferred output projection for the chunk -----------------
    out_ref[...] = (
        jnp.dot(h_buf[...].astype(why_ref.dtype), why_ref[...],
                preferred_element_type=jnp.float32)
        + by_ref[...]
    )

    # Final-state outputs (constant block index -> written back once at end).
    hfin_ref[...] = h_last
    cfin_ref[...] = c_last


# ---------------------------------------------------------------------------
# Parameter init (xavier_uniform, matching nn.init.xavier_uniform_)
# ---------------------------------------------------------------------------
def _xavier_uniform(key, shape):
    fan_out, fan_in = shape
    bound = (6.0 / (fan_in + fan_out)) ** 0.5
    return jax.random.uniform(key, shape, jnp.float32, minval=-bound, maxval=bound)


def make_lstm_params(key, input_size, hidden_size, output_size):
    names_shapes = [
        ("W_hi", (hidden_size, hidden_size)),
        ("W_hf", (hidden_size, hidden_size)),
        ("W_ho", (hidden_size, hidden_size)),
        ("W_hh", (hidden_size, hidden_size)),
        ("W_xi", (hidden_size, input_size)),
        ("W_xf", (hidden_size, input_size)),
        ("W_xo", (hidden_size, input_size)),
        ("W_xh", (hidden_size, input_size)),
        ("b_i", (hidden_size, 1)),
        ("b_f", (hidden_size, 1)),
        ("b_o", (hidden_size, 1)),
        ("b_h", (hidden_size, 1)),
        ("W_hy", (output_size, hidden_size)),
        ("b_y", (output_size, 1)),
    ]
    keys = jax.random.split(key, len(names_shapes))
    return {name: _xavier_uniform(k, shape)
            for (name, shape), k in zip(names_shapes, keys)}


# ---------------------------------------------------------------------------
# One-time param glue: fuse + transpose + lane-pad (NOT in the hot path)
# ---------------------------------------------------------------------------
def fuse_lstm_params(params, weight_dtype=jnp.bfloat16):
    H = params["W_hi"].shape[0]
    I = params["W_xi"].shape[1]
    O = params["W_hy"].shape[0]
    Hp = _round_up(H, LANE)       # gate slabs padded to full 128-lane spans
    O_pad = _round_up(O, LANE)

    def xblock(w):   # (H, I) -> (I, Hp)
        return jnp.pad(w.T.astype(jnp.float32), ((0, 0), (0, Hp - H)))

    def hblock(w):   # (H, H) -> (Hp, Hp)
        return jnp.pad(w.T.astype(jnp.float32), ((0, Hp - H), (0, Hp - H)))

    def bblock(b):   # (H, 1) -> (1, Hp)
        return jnp.pad(b.T.astype(jnp.float32), ((0, 0), (0, Hp - H)))

    wx = jnp.concatenate([xblock(params["W_xi"]), xblock(params["W_xf"]),
                          xblock(params["W_xo"]), xblock(params["W_xh"])], axis=1)
    wh = jnp.concatenate([hblock(params["W_hi"]), hblock(params["W_hf"]),
                          hblock(params["W_ho"]), hblock(params["W_hh"])], axis=1)
    b = jnp.concatenate([bblock(params["b_i"]), bblock(params["b_f"]),
                         bblock(params["b_o"]), bblock(params["b_h"])], axis=1)
    why = jnp.pad(params["W_hy"].T.astype(jnp.float32),
                  ((0, Hp - H), (0, O_pad - O)))
    by = jnp.pad(params["b_y"].T.astype(jnp.float32), ((0, 0), (0, O_pad - O)))

    return dict(
        wx=wx.astype(weight_dtype),      # bf16 weights halve VMEM residency;
        wh=wh.astype(weight_dtype),      # dots accumulate in f32
        why=why.astype(weight_dtype),
        b=b, by=by,                      # biases / elementwise math stay f32
        input_size=I, hidden_size=H, hidden_pad=Hp,
        output_size=O, o_pad=O_pad,
    )


# ---------------------------------------------------------------------------
# Wrapper: whole sequence in one Pallas call (matches LSTM.predict)
# ---------------------------------------------------------------------------
def lstm_predict(fused, sentence, hidden=None, memory=None, *, chunk=128):
    """sentence: (T, input_size). Returns (outputs (T, O), hidden (1, H), memory (1, H))."""
    T, I = sentence.shape
    H = fused["hidden_size"]
    Hp = fused["hidden_pad"]
    O = fused["output_size"]
    O_pad = fused["o_pad"]
    assert I == fused["input_size"]

    # Time chunking: Tc timesteps per grid iteration (sublane-aligned).
    Tc = _round_up(min(chunk, _round_up(T, SUBLANE)), SUBLANE)
    T_pad = _round_up(T, Tc)
    n_chunks = T_pad // Tc

    x = jnp.zeros((T_pad, I), jnp.float32).at[:T].set(sentence.astype(jnp.float32))

    if hidden is None:
        hidden = jnp.zeros((1, H), jnp.float32)
    if memory is None:
        memory = jnp.zeros((1, H), jnp.float32)
    h0 = jnp.zeros((1, Hp), jnp.float32).at[:, :H].set(
        hidden.astype(jnp.float32).reshape(1, H))
    c0 = jnp.zeros((1, Hp), jnp.float32).at[:, :H].set(
        memory.astype(jnp.float32).reshape(1, H))

    kernel = functools.partial(
        _lstm_chunk_kernel, seq_len=T, chunk=Tc, hidden_pad=Hp)

    # Explicit VMEM budget (weights may be double-buffered even though their
    # block index never changes); clamp to v7x's 64 MiB physical ceiling.
    wbytes = jnp.dtype(fused["wx"].dtype).itemsize
    est = (
        2 * wbytes * (I * 4 * Hp + Hp * 4 * Hp + Hp * O_pad)   # resident weights
        + 2 * 4 * (Tc * I + Tc * O_pad)                        # streamed x / out chunks
        + 4 * (Tc * 4 * Hp + Tc * Hp + 2 * Hp)                 # scratch buffers
        + 4 * (4 * Hp + O_pad + 2 * Hp)                        # biases, h0, c0
        + (4 << 20)                                            # margin
    )
    vmem_limit = int(min(max(est, 32 << 20), 64 << 20))

    grid_spec = pltpu.PrefetchScalarGridSpec(
        num_scalar_prefetch=0,
        grid=(n_chunks,),
        in_specs=[
            pl.BlockSpec((Tc, I), lambda n: (n, 0)),            # x chunk (streamed)
            pl.BlockSpec((1, Hp), lambda n: (0, 0)),            # h0
            pl.BlockSpec((1, Hp), lambda n: (0, 0)),            # c0
            pl.BlockSpec((I, 4 * Hp), lambda n: (0, 0)),        # wx  (VMEM-resident)
            pl.BlockSpec((Hp, 4 * Hp), lambda n: (0, 0)),       # wh  (VMEM-resident)
            pl.BlockSpec((1, 4 * Hp), lambda n: (0, 0)),        # b   (VMEM-resident)
            pl.BlockSpec((Hp, O_pad), lambda n: (0, 0)),        # why (VMEM-resident)
            pl.BlockSpec((1, O_pad), lambda n: (0, 0)),         # by  (VMEM-resident)
        ],
        out_specs=[
            pl.BlockSpec((Tc, O_pad), lambda n: (n, 0)),        # lane-dense output chunk
            pl.BlockSpec((1, Hp), lambda n: (0, 0)),            # final hidden
            pl.BlockSpec((1, Hp), lambda n: (0, 0)),            # final memory
        ],
        scratch_shapes=[
            pltpu.VMEM((1, Hp), jnp.float32),       # carried hidden state
            pltpu.VMEM((1, Hp), jnp.float32),       # carried memory state
            pltpu.VMEM((Tc, 4 * Hp), jnp.float32),  # hoisted input projection
            pltpu.VMEM((Tc, Hp), jnp.float32),      # per-step hidden rows
        ],
    )

    out_pad, h_fin, c_fin = pl.pallas_call(
        kernel,
        out_shape=(
            jax.ShapeDtypeStruct((T_pad, O_pad), jnp.float32),
            jax.ShapeDtypeStruct((1, Hp), jnp.float32),
            jax.ShapeDtypeStruct((1, Hp), jnp.float32),
        ),
        grid_spec=grid_spec,
        compiler_params=pltpu.CompilerParams(
            dimension_semantics=("arbitrary",),   # time recurrence is sequential
            vmem_limit_bytes=vmem_limit,
        ),
    )(x, h0, c0, fused["wx"], fused["wh"], fused["b"], fused["why"], fused["by"])

    return out_pad[:T, :O], h_fin[:, :H], c_fin[:, :H]


def lstm_forward(fused, x, hidden, memory):
    """Single-step forward (matches LSTM.forward). x: (input_size,) or (1, input_size)."""
    out, h, c = lstm_predict(fused, x.reshape(1, -1), hidden, memory)
    return out, h, c


# ---------------------------------------------------------------------------
# Pure-JAX reference (mirrors the PyTorch module exactly) for sanity checks
# ---------------------------------------------------------------------------
def lstm_predict_ref(p, sentence, hidden, memory):
    sig = jax.nn.sigmoid
    outs = []
    for t in range(sentence.shape[0]):
        xv = sentence[t].reshape(-1, 1)
        i = sig(p["W_hi"] @ hidden.T + p["W_xi"] @ xv + p["b_i"]).T
        f = sig(p["W_hf"] @ hidden.T + p["W_xf"] @ xv + p["b_f"]).T
        o = sig(p["W_ho"] @ hidden.T + p["W_xo"] @ xv + p["b_o"]).T
        g = jnp.tanh(p["W_hh"] @ hidden.T + p["W_xh"] @ xv + p["b_h"]).T
        memory = f * memory + i * g
        hidden = o * jnp.tanh(memory)
        outs.append((p["W_hy"] @ hidden.T + p["b_y"]).T)
    return jnp.concatenate(outs, axis=0), hidden, memory


if __name__ == "__main__":
    input_size, hidden_size, output_size = 16, 32, 8
    seq_len = 8

    root = jax.random.PRNGKey(0)
    k_params, k_seq = jax.random.split(root)
    params = make_lstm_params(k_params, input_size, hidden_size, output_size)

    sentence = jax.random.normal(k_seq, (seq_len, input_size), jnp.float32)
    h0 = jnp.zeros((1, hidden_size), jnp.float32)
    c0 = jnp.zeros((1, hidden_size), jnp.float32)

    # Reference.
    outputs_ref, hidden_ref, memory_ref = lstm_predict_ref(params, sentence, h0, c0)

    # 1) Exact-semantics check with f32 weights (tight tolerance).
    fused_f32 = fuse_lstm_params(params, weight_dtype=jnp.float32)
    out_f32, h_f32, c_f32 = lstm_predict(fused_f32, sentence, h0, c0)
    jax.block_until_ready(out_f32)
    assert out_f32.shape == (seq_len, output_size)
    assert jnp.allclose(out_f32, outputs_ref, atol=1e-4, rtol=1e-4), "f32 output mismatch"
    assert jnp.allclose(h_f32, hidden_ref, atol=1e-4, rtol=1e-4), "f32 hidden mismatch"
    assert jnp.allclose(c_f32, memory_ref, atol=1e-4, rtol=1e-4), "f32 memory mismatch"

    # 2) Production config: bf16 weights (VMEM-friendly), f32 accumulation/state.
    fused_bf16 = fuse_lstm_params(params, weight_dtype=jnp.bfloat16)
    out_b16, h_b16, c_b16 = lstm_predict(fused_bf16, sentence, h0, c0)
    jax.block_until_ready(out_b16)
    assert jnp.allclose(out_b16, outputs_ref, atol=5e-2, rtol=5e-2), "bf16 output mismatch"
    assert jnp.allclose(h_b16, hidden_ref, atol=5e-2, rtol=5e-2), "bf16 hidden mismatch"
    assert jnp.allclose(c_b16, memory_ref, atol=5e-2, rtol=5e-2), "bf16 memory mismatch"

    print("KERNEL_OK")
</pallas_src>

<mosaic_0001>
module attributes {stable_mosaic.version = 11 : i64} {
  func.func @_lstm_chunk_kernel(%arg0: i32, %arg1: memref<8x16xf32, #tpu.memory_space<vmem>>, %arg2: memref<1x128xf32, #tpu.memory_space<vmem>>, %arg3: memref<1x128xf32, #tpu.memory_space<vmem>>, %arg4: memref<16x512xf32, #tpu.memory_space<vmem>>, %arg5: memref<128x512xf32, #tpu.memory_space<vmem>>, %arg6: memref<1x512xf32, #tpu.memory_space<vmem>>, %arg7: memref<128x128xf32, #tpu.memory_space<vmem>>, %arg8: memref<1x128xf32, #tpu.memory_space<vmem>>, %arg9: memref<8x128xf32, #tpu.memory_space<vmem>>, %arg10: memref<1x128xf32, #tpu.memory_space<vmem>>, %arg11: memref<1x128xf32, #tpu.memory_space<vmem>>, %arg12: memref<1x128xf32, #tpu.memory_space<vmem>>, %arg13: memref<1x128xf32, #tpu.memory_space<vmem>>, %arg14: memref<8x512xf32, #tpu.memory_space<vmem>>, %arg15: memref<8x128xf32, #tpu.memory_space<vmem>>) attributes {dimension_semantics = [#tpu.dimension_semantics<arbitrary>], iteration_bounds = array<i64: 1>, scalar_prefetch = 0 : i64, scratch_operands = 4 : i64, tpu.core_type = #tpu.core_type<tc>, window_params = [{transform_indices = @transform_0, window_bounds = array<i64: 8, 16>}, {pipeline_mode = #tpu.pipeline_mode<synchronous>, transform_indices = @transform_1, window_bounds = array<i64: 1, 128>}, {pipeline_mode = #tpu.pipeline_mode<synchronous>, transform_indices = @transform_2, window_bounds = array<i64: 1, 128>}, {pipeline_mode = #tpu.pipeline_mode<synchronous>, transform_indices = @transform_3, window_bounds = array<i64: 16, 512>}, {pipeline_mode = #tpu.pipeline_mode<synchronous>, transform_indices = @transform_4, window_bounds = array<i64: 128, 512>}, {pipeline_mode = #tpu.pipeline_mode<synchronous>, transform_indices = @transform_5, window_bounds = array<i64: 1, 512>}, {pipeline_mode = #tpu.pipeline_mode<synchronous>, transform_indices = @transform_6, window_bounds = array<i64: 128, 128>}, {pipeline_mode = #tpu.pipeline_mode<synchronous>, transform_indices = @transform_7, window_bounds = array<i64: 1, 128>}, {transform_indices = @transform_8, window_bounds = array<i64: 8, 128>}, {pipeline_mode = #tpu.pipeline_mode<synchronous>, transform_indices = @transform_9, window_bounds = array<i64: 1, 128>}, {pipeline_mode = #tpu.pipeline_mode<synchronous>, transform_indices = @transform_10, window_bounds = array<i64: 1, 128>}]} {
    %c0_i32 = arith.constant 0 : i32
    %0 = arith.cmpi eq, %arg0, %c0_i32 : i32
    %1 = arith.extui %0 : i1 to i32
    %c0_i32_0 = arith.constant 0 : i32
    %2 = arith.cmpi ne, %1, %c0_i32_0 : i32
    scf.if %2 {
      %c0_31 = arith.constant 0 : index
      %c0_32 = arith.constant 0 : index
      %25 = vector.load %arg2[%c0_31, %c0_32] : memref<1x128xf32, #tpu.memory_space<vmem>>, vector<1x128xf32>
      %c0_33 = arith.constant 0 : index
      %c0_34 = arith.constant 0 : index
      %26 = vector.load %arg12[%c0_33, %c0_34] : memref<1x128xf32, #tpu.memory_space<vmem>>, vector<1x128xf32>
      tpu.vector_store %arg12[%c0_33, %c0_34], %25 {strides = array<i32>} : memref<1x128xf32, #tpu.memory_space<vmem>>, vector<1x128xf32>,
      %c0_35 = arith.constant 0 : index
      %c0_36 = arith.constant 0 : index
      %27 = vector.load %arg3[%c0_35, %c0_36] : memref<1x128xf32, #tpu.memory_space<vmem>>, vector<1x128xf32>
      %c0_37 = arith.constant 0 : index
      %c0_38 = arith.constant 0 : index
      %28 = vector.load %arg13[%c0_37, %c0_38] : memref<1x128xf32, #tpu.memory_space<vmem>>, vector<1x128xf32>
      tpu.vector_store %arg13[%c0_37, %c0_38], %27 {strides = array<i32>} : memref<1x128xf32, #tpu.memory_space<vmem>>, vector<1x128xf32>,
    } else {
    }
    %c0 = arith.constant 0 : index
    %c0_1 = arith.constant 0 : index
    %3 = vector.load %arg1[%c0, %c0_1] : memref<8x16xf32, #tpu.memory_space<vmem>>, vector<8x16xf32>
    %c0_2 = arith.constant 0 : index
    %c0_3 = arith.constant 0 : index
    %4 = vector.load %arg4[%c0_2, %c0_3] : memref<16x512xf32, #tpu.memory_space<vmem>>, vector<16x512xf32>
    %cst = arith.constant dense<0.000000e+00> : vector<8x512xf32>
    %5 = tpu.matmul %3, %4, %cst {dimension_numbers = #tpu.dot_dimension_numbers<[1], [0], [0], [1], [0, 0, 1, 1], [], []>} : vector<8x16xf32>, vector<16x512xf32>, vector<8x512xf32> -> vector<8x512xf32>
    %c0_4 = arith.constant 0 : index
    %c0_5 = arith.constant 0 : index
    %6 = vector.load %arg6[%c0_4, %c0_5] : memref<1x512xf32, #tpu.memory_space<vmem>>, vector<1x512xf32>
    %7 = vector.broadcast %6 : vector<1x512xf32> to vector<8x512xf32>
    %8 = arith.addf %5, %7 : vector<8x512xf32>
    %c0_6 = arith.constant 0 : index
    %c0_7 = arith.constant 0 : index
    %9 = vector.load %arg14[%c0_6, %c0_7] : memref<8x512xf32, #tpu.memory_space<vmem>>, vector<8x512xf32>
    tpu.vector_store %arg14[%c0_6, %c0_7], %8 {strides = array<i32>} : memref<8x512xf32, #tpu.memory_space<vmem>>, vector<8x512xf32>,
    %c0_8 = arith.constant 0 : index
    %c0_9 = arith.constant 0 : index
    %10 = vector.load %arg12[%c0_8, %c0_9] : memref<1x128xf32, #tpu.memory_space<vmem>>, vector<1x128xf32>
    %c0_10 = arith.constant 0 : index
    %c0_11 = arith.constant 0 : index
    %11 = vector.load %arg13[%c0_10, %c0_11] : memref<1x128xf32, #tpu.memory_space<vmem>>, vector<1x128xf32>
    %c0_i32_12 = arith.constant 0 : i32
    %c8_i32 = arith.constant 8 : i32
    %12 = arith.addi %c0_i32_12, %c8_i32 : i32
    %c1_i32 = arith.constant 1 : i32
    %13:2 = scf.for %arg16 = %c0_i32_12 to %12 step %c1_i32 iter_args(%arg17 = %10, %arg18 = %11) -> (vector<1x128xf32>, vector<1x128xf32>)  : i32 {
      %25 = arith.index_cast %arg16 : i32 to index
      %c0_31 = arith.constant 0 : index
      %26 = vector.load %arg14[%25, %c0_31] : memref<8x512xf32, #tpu.memory_space<vmem>>, vector<1x512xf32>
      %c0_32 = arith.constant 0 : index
      %c0_33 = arith.constant 0 : index
      %27 = vector.load %arg5[%c0_32, %c0_33] : memref<128x512xf32, #tpu.memory_space<vmem>>, vector<128x512xf32>
      %cst_34 = arith.constant dense<0.000000e+00> : vector<1x512xf32>
      %28 = tpu.matmul %arg17, %27, %cst_34 {dimension_numbers = #tpu.dot_dimension_numbers<[1], [0], [0], [1], [0, 0, 1, 1], [], []>} : vector<1x128xf32>, vector<128x512xf32>, vector<1x512xf32> -> vector<1x512xf32>
      %29 = arith.addf %26, %28 : vector<1x512xf32>
      %30 = vector.extract_strided_slice %29 {offsets = [0, 0], sizes = [1, 128], strides = [1, 1]} : vector<1x512xf32> to vector<1x128xf32>
      %31 = arith.negf %30 : vector<1x128xf32>
      %32 = math.exp %31 : vector<1x128xf32>
      %cst_35 = arith.constant 1.000000e+00 : f32
      %33 = vector.broadcast %cst_35 : f32 to vector<1x128xf32>
      %34 = arith.addf %33, %32 : vector<1x128xf32>
      %35 = arith.divf %33, %34 : vector<1x128xf32>
      %36 = vector.extract_strided_slice %29 {offsets = [0, 128], sizes = [1, 128], strides = [1, 1]} : vector<1x512xf32> to vector<1x128xf32>
      %37 = arith.negf %36 : vector<1x128xf32>
      %38 = math.exp %37 : vector<1x128xf32>
      %cst_36 = arith.constant 1.000000e+00 : f32
      %39 = vector.broadcast %cst_36 : f32 to vector<1x128xf32>
      %40 = arith.addf %39, %38 : vector<1x128xf32>
      %41 = arith.divf %39, %40 : vector<1x128xf32>
      %42 = vector.extract_strided_slice %29 {offsets = [0, 256], sizes = [1, 128], strides = [1, 1]} : vector<1x512xf32> to vector<1x128xf32>
      %43 = arith.negf %42 : vector<1x128xf32>
      %44 = math.exp %43 : vector<1x128xf32>
      %cst_37 = arith.constant 1.000000e+00 : f32
      %45 = vector.broadcast %cst_37 : f32 to vector<1x128xf32>
      %46 = arith.addf %45, %44 : vector<1x128xf32>
      %47 = arith.divf %45, %46 : vector<1x128xf32>
      %48 = vector.extract_strided_slice %29 {offsets = [0, 384], sizes = [1, 128], strides = [1, 1]} : vector<1x512xf32> to vector<1x128xf32>
      %49 = math.tanh %48 : vector<1x128xf32>
      %50 = arith.mulf %41, %arg18 : vector<1x128xf32>
      %51 = arith.mulf %35, %49 : vector<1x128xf32>
      %52 = arith.addf %50, %51 : vector<1x128xf32>
      %53 = math.tanh %52 : vector<1x128xf32>
      %54 = arith.mulf %47, %53 : vector<1x128xf32>
      %c8_i32_38 = arith.constant 8 : i32
      %55 = arith.muli %arg0, %c8_i32_38 : i32
      %56 = arith.addi %55, %arg16 : i32
      %c8_i32_39 = arith.constant 8 : i32
      %57 = arith.cmpi slt, %56, %c8_i32_39 : i32
      %58 = arith.select %57, %54, %arg17 : vector<1x128xf32>
      %59 = arith.select %57, %52, %arg18 : vector<1x128xf32>
      %60 = arith.index_cast %arg16 : i32 to index
      %c0_40 = arith.constant 0 : index
      %61 = vector.load %arg15[%60, %c0_40] : memref<8x128xf32, #tpu.memory_space<vmem>>, vector<1x128xf32>
      tpu.vector_store %arg15[%60, %c0_40], %58 {strides = array<i32>} : memref<8x128xf32, #tpu.memory_space<vmem>>, vector<1x128xf32>,
      scf.yield %58, %59 : vector<1x128xf32>, vector<1x128xf32>
    }
    %c8_i32_13 = arith.constant 8 : i32
    %c0_14 = arith.constant 0 : index
    %c0_15 = arith.constant 0 : index
    %14 = vector.load %arg12[%c0_14, %c0_15] : memref<1x128xf32, #tpu.memory_space<vmem>>, vector<1x128xf32>
    tpu.vector_store %arg12[%c0_14, %c0_15], %13#0 {strides = array<i32>} : memref<1x128xf32, #tpu.memory_space<vmem>>, vector<1x128xf32>,
    %c0_16 = arith.constant 0 : index
    %c0_17 = arith.constant 0 : index
    %15 = vector.load %arg13[%c0_16, %c0_17] : memref<1x128xf32, #tpu.memory_space<vmem>>, vector<1x128xf32>
    tpu.vector_store %arg13[%c0_16, %c0_17], %13#1 {strides = array<i32>} : memref<1x128xf32, #tpu.memory_space<vmem>>, vector<1x128xf32>,
    %c0_18 = arith.constant 0 : index
    %c0_19 = arith.constant 0 : index
    %16 = vector.load %arg15[%c0_18, %c0_19] : memref<8x128xf32, #tpu.memory_space<vmem>>, vector<8x128xf32>
    %c0_20 = arith.constant 0 : index
    %c0_21 = arith.constant 0 : index
    %17 = vector.load %arg7[%c0_20, %c0_21] : memref<128x128xf32, #tpu.memory_space<vmem>>, vector<128x128xf32>
    %cst_22 = arith.constant dense<0.000000e+00> : vector<8x128xf32>
    %18 = tpu.matmul %16, %17, %cst_22 {dimension_numbers = #tpu.dot_dimension_numbers<[1], [0], [0], [1], [0, 0, 1, 1], [], []>} : vector<8x128xf32>, vector<128x128xf32>, vector<8x128xf32> -> vector<8x128xf32>
    %c0_23 = arith.constant 0 : index
    %c0_24 = arith.constant 0 : index
    %19 = vector.load %arg8[%c0_23, %c0_24] : memref<1x128xf32, #tpu.memory_space<vmem>>, vector<1x128xf32>
    %20 = vector.broadcast %19 : vector<1x128xf32> to vector<8x128xf32>
    %21 = arith.addf %18, %20 : vector<8x128xf32>
    %c0_25 = arith.constant 0 : index
    %c0_26 = arith.constant 0 : index
    %22 = vector.load %arg9[%c0_25, %c0_26] : memref<8x128xf32, #tpu.memory_space<vmem>>, vector<8x128xf32>
    tpu.vector_store %arg9[%c0_25, %c0_26], %21 {strides = array<i32>} : memref<8x128xf32, #tpu.memory_space<vmem>>, vector<8x128xf32>,
    %c0_27 = arith.constant 0 : index
    %c0_28 = arith.constant 0 : index
    %23 = vector.load %arg10[%c0_27, %c0_28] : memref<1x128xf32, #tpu.memory_space<vmem>>, vector<1x128xf32>
    tpu.vector_store %arg10[%c0_27, %c0_28], %13#0 {strides = array<i32>} : memref<1x128xf32, #tpu.memory_space<vmem>>, vector<1x128xf32>,
    %c0_29 = arith.constant 0 : index
    %c0_30 = arith.constant 0 : index
    %24 = vector.load %arg11[%c0_29, %c0_30] : memref<1x128xf32, #tpu.memory_space<vmem>>, vector<1x128xf32>
    tpu.vector_store %arg11[%c0_29, %c0_30], %13#1 {strides = array<i32>} : memref<1x128xf32, #tpu.memory_space<vmem>>, vector<1x128xf32>,
    return
  }
  func.func @transform_0(%arg0: i32) -> (i32, i32) {
    %c0_i32 = arith.constant 0 : i32
    %c0_i32_0 = arith.constant 0 : i32
    return %arg0, %c0_i32 : i32, i32
  }
  func.func @transform_1(%arg0: i32) -> (i32, i32) {
    %c0_i32 = arith.constant 0 : i32
    %c0_i32_0 = arith.constant 0 : i32
    %c0_i32_1 = arith.constant 0 : i32
    return %c0_i32, %c0_i32_0 : i32, i32
  }
  func.func @transform_2(%arg0: i32) -> (i32, i32) {
    %c0_i32 = arith.constant 0 : i32
    %c0_i32_0 = arith.constant 0 : i32
    %c0_i32_1 = arith.constant 0 : i32
    return %c0_i32, %c0_i32_0 : i32, i32
  }
  func.func @transform_3(%arg0: i32) -> (i32, i32) {
    %c0_i32 = arith.constant 0 : i32
    %c0_i32_0 = arith.constant 0 : i32
    %c0_i32_1 = arith.constant 0 : i32
    return %c0_i32, %c0_i32_0 : i32, i32
  }
  func.func @transform_4(%arg0: i32) -> (i32, i32) {
    %c0_i32 = arith.constant 0 : i32
    %c0_i32_0 = arith.constant 0 : i32
    %c0_i32_1 = arith.constant 0 : i32
    return %c0_i32, %c0_i32_0 : i32, i32
  }
  func.func @transform_5(%arg0: i32) -> (i32, i32) {
    %c0_i32 = arith.constant 0 : i32
    %c0_i32_0 = arith.constant 0 : i32
    %c0_i32_1 = arith.constant 0 : i32
    return %c0_i32, %c0_i32_0 : i32, i32
  }
  func.func @transform_6(%arg0: i32) -> (i32, i32) {
    %c0_i32 = arith.constant 0 : i32
    %c0_i32_0 = arith.constant 0 : i32
    %c0_i32_1 = arith.constant 0 : i32
    return %c0_i32, %c0_i32_0 : i32, i32
  }
  func.func @transform_7(%arg0: i32) -> (i32, i32) {
    %c0_i32 = arith.constant 0 : i32
    %c0_i32_0 = arith.constant 0 : i32
    %c0_i32_1 = arith.constant 0 : i32
    return %c0_i32, %c0_i32_0 : i32, i32
  }
  func.func @transform_8(%arg0: i32) -> (i32, i32) {
    %c0_i32 = arith.constant 0 : i32
    %c0_i32_0 = arith.constant 0 : i32
    return %arg0, %c0_i32 : i32, i32
  }
  func.func @transform_9(%arg0: i32) -> (i32, i32) {
    %c0_i32 = arith.constant 0 : i32
    %c0_i32_0 = arith.constant 0 : i32
    %c0_i32_1 = arith.constant 0 : i32
    return %c0_i32, %c0_i32_0 : i32, i32
  }
  func.func @transform_10(%arg0: i32) -> (i32, i32) {
    %c0_i32 = arith.constant 0 : i32
    %c0_i32_0 = arith.constant 0 : i32
    %c0_i32_1 = arith.constant 0 : i32
    return %c0_i32, %c0_i32_0 : i32, i32
  }
}

</mosaic_0001>

<llo_original>
// kernel: tpu_custom_call.1
$region0: #{tpu_custom_call.1}
  #allocation0 [shape = 'u32[]', space=smem, size = 0x4, offset = 0x4, fixed_abs, tag = 'smem constant byte address 0x4 - core index']
  #allocation1 [shape = 'u32[144,128]{1,0:T(1,128)}', space=vmem, size = 0x12000, scoped, tag = 'internal scratch']
  #allocation2 [shape = 'f32[1,128]{1,0:T(1,128)}', space=vmem, size = 0x200, scoped, tag = 'scratch operand']
  #allocation3 [shape = 'f32[1,128]{1,0:T(1,128)}', space=vmem, size = 0x200, scoped, tag = 'scratch operand']
  #allocation4 [shape = 'f32[8,512]{1,0:T(8,128)}', space=vmem, size = 0x4000, scoped, tag = 'scratch operand']
  #allocation5 [shape = 'f32[8,128]{1,0:T(8,128)}', space=vmem, size = 0x1000, scoped, tag = 'scratch operand']
  %s0 = inlined_call_operand.hbm [shape: f32[8,16], index: 0, kind: input, shape index: {}]
  %s1 = inlined_call_operand.vmem [shape: f32[1,128], index: 1, kind: input, shape index: {}]
  %s2 = inlined_call_operand.vmem [shape: f32[1,128], index: 2, kind: input, shape index: {}]
  %s3 = inlined_call_operand.hbm [shape: f32[16,512], index: 3, kind: input, shape index: {}]
  %s4 = inlined_call_operand.hbm [shape: f32[128,512], index: 4, kind: input, shape index: {}]
  %s5 = inlined_call_operand.vmem [shape: f32[1,512], index: 5, kind: input, shape index: {}]
  %s6 = inlined_call_operand.hbm [shape: f32[128,128], index: 6, kind: input, shape index: {}]
  %s7 = inlined_call_operand.vmem [shape: f32[1,128], index: 7, kind: input, shape index: {}]
  %s8 = inlined_call_operand.hbm [shape: f32[8,128], index: 8, kind: output, shape index: {0}]
  %s9 = inlined_call_operand.hbm [shape: f32[1,128], index: 9, kind: output, shape index: {1}]
  %s10 = inlined_call_operand.hbm [shape: f32[1,128], index: 10, kind: output, shape index: {2}]
  %11 = xla_tuple %s8, %s9, %s10
  %s12 = sld [smem:[#allocation0]]
  $region85: #{tpu_custom_call.1} parent=0
    _
  %s14 = ssub.s32 1, %s12
  %s15 = scalar_select 0, %s14, %s12
  $region1: #{tpu_custom_call.1} parent=0
    #allocation6 [shape = 'u8[4096]{0}', space=vmem, size = 0x1000, scoped, tag = 'input window, operand 0, single buffered']
    #allocation7 [shape = 's32[1]{0}', space=sflag, size = 0x4, scoped, tag = 'scoped memory for tpu_custom_call.1']
    #allocation8 [shape = 's32[1]{0}', space=sflag, size = 0x4, scoped, tag = 'scoped memory for tpu_custom_call.1']
    #allocation9 [shape = 'u8[32768]{0}', space=vmem, size = 0x8000, scoped, tag = 'input window, operand 3, single buffered']
    #allocation10 [shape = 's32[1]{0}', space=sflag, size = 0x4, scoped, tag = 'scoped memory for tpu_custom_call.1']
    #allocation11 [shape = 'u8[262144]{0}', space=vmem, size = 0x40000, scoped, tag = 'input window, operand 4, single buffered']
    #allocation12 [shape = 'u8[65536]{0}', space=vmem, size = 0x10000, scoped, tag = 'input window, operand 6, single buffered']
    #allocation13 [shape = 's32[1]{0}', space=sflag, size = 0x4, scoped, tag = 'scoped memory for tpu_custom_call.1']
    #allocation14 [shape = 'u8[4096]{0}', space=vmem, size = 0x1000, scoped, tag = 'output window, operand 0, single buffered']
    #allocation15 [shape = 'u8[512]{0}', space=vmem, size = 0x400, scoped, tag = 'output window, operand 1, single buffered']
    #allocation16 [shape = 's32[1]{0}', space=sflag, size = 0x4, scoped, tag = 'scoped memory for tpu_custom_call.1']
    #allocation17 [shape = 'u8[512]{0}', space=vmem, size = 0x400, scoped, tag = 'output window, operand 2, single buffered']
    %16 = vsyncpa [#allocation7], 0
    %17 = vsyncpa [#allocation10], 0
    %18 = vsyncpa [#allocation13], 0
    %19 = vsyncpa [#allocation8], 0
    %20 = vsyncpa [#allocation16], 0
    // Predicated region
    $region2: #{tpu_custom_call.1} parent=1 // pred_check
      _
    $region3: #{tpu_custom_call.1} parent=1 // pred_check_branch
      %22 = sbr.rel (0) target = $region5
    $region4: #{tpu_custom_call.1} parent=1 // pred_region
      %s24 = ssub.s32 128, 128
      %25 = vsyncadd [#allocation7], %s24
      %s27 = sshll.u32 [#allocation6], 4
      %s28 = int_to_ptr.vmem [resolvable:$true] %s27
      %30 = dma.hbm_to_vmem [thread:$0]  %s0, 128, %s28, [#allocation7]
    $region5: #{tpu_custom_call.1} parent=1 // pred_fallthru
      _
    // Predicated region
    $region6: #{tpu_custom_call.1} parent=1 // pred_check
      _
    $region7: #{tpu_custom_call.1} parent=1 // pred_check_branch
      %32 = sbr.rel (0) target = $region9
    $region8: #{tpu_custom_call.1} parent=1 // pred_region
      _
    $region9: #{tpu_custom_call.1} parent=1 // pred_fallthru
      _
    // Predicated region
    $region10: #{tpu_custom_call.1} parent=1 // pred_check
      _
    $region11: #{tpu_custom_call.1} parent=1 // pred_check_branch
      %34 = sbr.rel (0) target = $region13
    $region12: #{tpu_custom_call.1} parent=1 // pred_region
      _
    $region13: #{tpu_custom_call.1} parent=1 // pred_fallthru
      _
    // Predicated region
    $region14: #{tpu_custom_call.1} parent=1 // pred_check
      _
    $region15: #{tpu_custom_call.1} parent=1 // pred_check_branch
      %36 = sbr.rel (0) target = $region17
    $region16: #{tpu_custom_call.1} parent=1 // pred_region
      %s38 = ssub.s32 1024, 1024
      %39 = vsyncadd [#allocation10], %s38
      %s40 = sshll.u32 [#allocation9], 4
      %s41 = int_to_ptr.vmem [resolvable:$true] %s40
      %46 = dma.hbm_to_vmem [thread:$0]  %s3, 1024, %s41, [#allocation10], 512, 512, 32
    $region17: #{tpu_custom_call.1} parent=1 // pred_fallthru
      _
    // Predicated region
    $region18: #{tpu_custom_call.1} parent=1 // pred_check
      _
    $region19: #{tpu_custom_call.1} parent=1 // pred_check_branch
      %48 = sbr.rel (0) target = $region21
    $region20: #{tpu_custom_call.1} parent=1 // pred_region
      %s50 = ssub.s32 8192, 8192
      %51 = vsyncadd [#allocation10], %s50
      %s52 = sshll.u32 [#allocation11], 4
      %s53 = int_to_ptr.vmem [resolvable:$true] %s52
      %58 = dma.hbm_to_vmem [thread:$0]  %s4, 8192, %s53, [#allocation10], 512, 512, 32
    $region21: #{tpu_custom_call.1} parent=1 // pred_fallthru
      _
    // Predicated region
    $region22: #{tpu_custom_call.1} parent=1 // pred_check
      _
    $region23: #{tpu_custom_call.1} parent=1 // pred_check_branch
      %60 = sbr.rel (0) target = $region25
    $region24: #{tpu_custom_call.1} parent=1 // pred_region
      _
    $region25: #{tpu_custom_call.1} parent=1 // pred_fallthru
      _
    // Predicated region
    $region26: #{tpu_custom_call.1} parent=1 // pred_check
      _
    $region27: #{tpu_custom_call.1} parent=1 // pred_check_branch
      %62 = sbr.rel (0) target = $region29
    $region28: #{tpu_custom_call.1} parent=1 // pred_region
      %s64 = ssub.s32 2048, 2048
      %65 = vsyncadd [#allocation13], %s64
      %s66 = sshll.u32 [#allocation12], 4
      %s67 = int_to_ptr.vmem [resolvable:$true] %s66
      %72 = dma.hbm_to_vmem [thread:$0]  %s6, 2048, %s67, [#allocation13], 128, 128, 8
    $region29: #{tpu_custom_call.1} parent=1 // pred_fallthru
      _
    // Predicated region
    $region30: #{tpu_custom_call.1} parent=1 // pred_check
      _
    $region31: #{tpu_custom_call.1} parent=1 // pred_check_branch
      %74 = sbr.rel (0) target = $region33
    $region32: #{tpu_custom_call.1} parent=1 // pred_region
      _
    $region33: #{tpu_custom_call.1} parent=1 // pred_fallthru
      _
    // Predicated region
    $region34: #{tpu_custom_call.1} parent=1 // pred_check
      _
    $region35: #{tpu_custom_call.1} parent=1 // pred_check_branch
      %76 = sbr.rel (0) target = $region37
    $region36: #{tpu_custom_call.1} parent=1 // pred_region
      %77 = dma.done [#allocation7], 128
    $region37: #{tpu_custom_call.1} parent=1 // pred_fallthru
      _
    // Predicated region
    $region38: #{tpu_custom_call.1} parent=1 // pred_check
      _
    $region39: #{tpu_custom_call.1} parent=1 // pred_check_branch
      %79 = sbr.rel (0) target = $region41
    $region40: #{tpu_custom_call.1} parent=1 // pred_region
      %80 = dma.done [#allocation10], 1024
    $region41: #{tpu_custom_call.1} parent=1 // pred_fallthru
      _
    // Predicated region
    $region42: #{tpu_custom_call.1} parent=1 // pred_check
      _
    $region43: #{tpu_custom_call.1} parent=1 // pred_check_branch
      %82 = sbr.rel (0) target = $region45
    $region44: #{tpu_custom_call.1} parent=1 // pred_region
      %83 = dma.done [#allocation10], 8192
    $region45: #{tpu_custom_call.1} parent=1 // pred_fallthru
      _
    // Predicated region
    $region46: #{tpu_custom_call.1} parent=1 // pred_check
      _
    $region47: #{tpu_custom_call.1} parent=1 // pred_check_branch
      %85 = sbr.rel (0) target = $region49
    $region48: #{tpu_custom_call.1} parent=1 // pred_region
      %86 = dma.done [#allocation13], 2048
    $region49: #{tpu_custom_call.1} parent=1 // pred_fallthru
      _
    %p87 = scmp.eq.s32.totalorder 0, 0
    // Predicated region
    $region50: #{tpu_custom_call.1} parent=1 // pred_check
      %p88 = pneg %p87
    $region51: #{tpu_custom_call.1} parent=1 // pred_check_branch
      %90 = sbr.rel (%p88) target = $region53
    $region52: #{tpu_custom_call.1} parent=1 // pred_region
      %v91 = vld [vmem:[%s1] sm:$0x1]
      %92 = vst [vmem:[#allocation2] sm:$0x1] %v91
      %v93 = vld [vmem:[%s2] sm:$0x1]
      %94 = vst [vmem:[#allocation3] sm:$0x1] %v93
    $region53: #{tpu_custom_call.1} parent=1 // pred_fallthru
      _
    %v95 = vld [vmem:[#allocation6] sm:$0xff]
    %v96 = vld [vmem:[#allocation9] sm:$0xff]
    %v97 = vld [vmem:[#allocation9 + $0x8] sm:$0xff]
    %v98 = vld [vmem:[#allocation9 + $0x10] sm:$0xff]
    %v99 = vld [vmem:[#allocation9 + $0x18] sm:$0xff]
    %v100 = vld [vmem:[#allocation9 + $0x20] sm:$0xff]
    %v101 = vld [vmem:[#allocation9 + $0x28] sm:$0xff]
    %v102 = vld [vmem:[#allocation9 + $0x30] sm:$0xff]
    %v103 = vld [vmem:[#allocation9 + $0x38] sm:$0xff]
    %v104 = vld [vmem:[%s5] sm:$0xf]
    %v106 = vlaneseq
    %v107 = vshrl.u32 %v106, 7
    %v108 = vsub.s32 0, %v107
    %v109 = vrot.slane %v104, %v108
    %v110 = vlaneseq
    %v111 = vshrl.u32 %v110, 7
    %v112 = vsub.s32 1, %v111
    %v113 = vrot.slane %v104, %v112
    %v114 = vlaneseq
    %v115 = vshrl.u32 %v114, 7
    %v116 = vsub.s32 2, %v115
    %v117 = vrot.slane %v104, %v116
    %v118 = vlaneseq
    %v119 = vshrl.u32 %v118, 7
    %v120 = vsub.s32 3, %v119
    %v121 = vrot.slane %v104, %v120
    %vm126 = vcmask 130048
    %v128 = vsel %vm126, %v95, 0
    %130 = vmatprep.subr.mxu0 0.0
    %131 = vmatpush1.msra.mxu0 0.0
    %132 = vmatprep.subr.mxu0 0.0
    %133 = vmatpush1.msra.mxu0 0.0
    %134 = vmatprep.subr.mxu0 0.0
    %135 = vmatpush1.msra.mxu0 0.0
    %136 = vmatprep.subr.mxu0 0.0
    %137 = vmatpush1.msra.mxu0 0.0
    %138 = vmatprep.subr.mxu0 0.0
    %139 = vmatpush1.msra.mxu0 0.0
    %140 = vmatprep.subr.mxu0 0.0
    %141 = vmatpush1.msra.mxu0 0.0
    %142 = vmatprep.subr.mxu0 0.0
    %143 = vmatpush1.msra.mxu0 0.0
    %144 = vmatprep.subr.mxu0 0.0
    %145 = vmatpush1.msra.mxu0 0.0
    %146 = vmatprep.subr.mxu0 0.0
    %147 = vmatpush1.msra.mxu0 0.0
    %148 = vmatprep.subr.mxu0 0.0
    %149 = vmatpush1.msra.mxu0 0.0
    %150 = vmatprep.subr.mxu0 0.0
    %151 = vmatpush1.msra.mxu0 0.0
    %152 = vmatprep.subr.mxu0 0.0
    %153 = vmatpush1.msra.mxu0 0.0
    %154 = vmatprep.subr.mxu0 0.0
    %155 = vmatpush1.msra.mxu0 0.0
    %156 = vmatprep.subr.mxu0 0.0
    %157 = vmatpush1.msra.mxu0 0.0
    %158 = vmatprep.subr.mxu0 %v101
    %159 = vmatpush1.msra.mxu0 %v100
    %160 = vmatprep.subr.mxu0 %v97
    %161 = vmatpush1.msra.mxu0 %v96
    %162 = vmatprep.subr.mxu0 0.0
    %163 = vmatpush2.msra.mxu0 0.0
    %164 = vmatprep.subr.mxu0 0.0
    %165 = vmatpush2.msra.mxu0 0.0
    %166 = vmatprep.subr.mxu0 0.0
    %167 = vmatpush2.msra.mxu0 0.0
    %168 = vmatprep.subr.mxu0 0.0
    %169 = vmatpush2.msra.mxu0 0.0
    %170 = vmatprep.subr.mxu0 0.0
    %171 = vmatpush2.msra.mxu0 0.0
    %172 = vmatprep.subr.mxu0 0.0
    %173 = vmatpush2.msra.mxu0 0.0
    %174 = vmatprep.subr.mxu0 0.0
    %175 = vmatpush2.msra.mxu0 0.0
    %176 = vmatprep.subr.mxu0 0.0
    %177 = vmatpush2.msra.mxu0 0.0
    %178 = vmatprep.subr.mxu0 0.0
    %179 = vmatpush2.msra.mxu0 0.0
    %180 = vmatprep.subr.mxu0 0.0
    %181 = vmatpush2.msra.mxu0 0.0
    %182 = vmatprep.subr.mxu0 0.0
    %183 = vmatpush2.msra.mxu0 0.0
    %184 = vmatprep.subr.mxu0 0.0
    %185 = vmatpush2.msra.mxu0 0.0
    %186 = vmatprep.subr.mxu0 0.0
    %187 = vmatpush2.msra.mxu0 0.0
    %188 = vmatprep.subr.mxu0 0.0
    %189 = vmatpush2.msra.mxu0 0.0
    %190 = vmatprep.subr.mxu0 0.0
    %191 = vmatpush2.msra.mxu0 0.0
    %192 = vmatprep.subr.mxu0 0.0
    %193 = vmatpush2.msra.mxu0 0.0
    %194 = vmatprep.mubr.f32.mxu0 0.0
    %195 = vmatmul.mubr.f32.gmra.mxu0 %v128
    %v196 = vpop.f32.mrf.mxu0
    %v197 = vadd.f32 %v109, %v196
    %v198 = vpop.f32.mrf.mxu0
    %v199 = vadd.f32 %v113, %v198
    %200 = vdwg.mxu0
    %201 = vmatprep.subr.mxu0 0.0
    %202 = vmatpush1.msra.mxu0 0.0
    %203 = vmatprep.subr.mxu0 0.0
    %204 = vmatpush1.msra.mxu0 0.0
    %205 = vmatprep.subr.mxu0 0.0
    %206 = vmatpush1.msra.mxu0 0.0
    %207 = vmatprep.subr.mxu0 0.0
    %208 = vmatpush1.msra.mxu0 0.0
    %209 = vmatprep.subr.mxu0 0.0
    %210 = vmatpush1.msra.mxu0 0.0
    %211 = vmatprep.subr.mxu0 0.0
    %212 = vmatpush1.msra.mxu0 0.0
    %213 = vmatprep.subr.mxu0 0.0
    %214 = vmatpush1.msra.mxu0 0.0
    %215 = vmatprep.subr.mxu0 0.0
    %216 = vmatpush1.msra.mxu0 0.0
    %217 = vmatprep.subr.mxu0 0.0
    %218 = vmatpush1.msra.mxu0 0.0
    %219 = vmatprep.subr.mxu0 0.0
    %220 = vmatpush1.msra.mxu0 0.0
    %221 = vmatprep.subr.mxu0 0.0
    %222 = vmatpush1.msra.mxu0 0.0
    %223 = vmatprep.subr.mxu0 0.0
    %224 = vmatpush1.msra.mxu0 0.0
    %225 = vmatprep.subr.mxu0 0.0
    %226 = vmatpush1.msra.mxu0 0.0
    %227 = vmatprep.subr.mxu0 0.0
    %228 = vmatpush1.msra.mxu0 0.0
    %229 = vmatprep.subr.mxu0 %v103
    %230 = vmatpush1.msra.mxu0 %v102
    %231 = vmatprep.subr.mxu0 %v99
    %232 = vmatpush1.msra.mxu0 %v98
    %233 = vmatprep.subr.mxu0 0.0
    %234 = vmatpush2.msra.mxu0 0.0
    %235 = vmatprep.subr.mxu0 0.0
    %236 = vmatpush2.msra.mxu0 0.0
    %237 = vmatprep.subr.mxu0 0.0
    %238 = vmatpush2.msra.mxu0 0.0
    %239 = vmatprep.subr.mxu0 0.0
    %240 = vmatpush2.msra.mxu0 0.0
    %241 = vmatprep.subr.mxu0 0.0
    %242 = vmatpush2.msra.mxu0 0.0
    %243 = vmatprep.subr.mxu0 0.0
    %244 = vmatpush2.msra.mxu0 0.0
    %245 = vmatprep.subr.mxu0 0.0
    %246 = vmatpush2.msra.mxu0 0.0
    %247 = vmatprep.subr.mxu0 0.0
    %248 = vmatpush2.msra.mxu0 0.0
    %249 = vmatprep.subr.mxu0 0.0
    %250 = vmatpush2.msra.mxu0 0.0
    %251 = vmatprep.subr.mxu0 0.0
    %252 = vmatpush2.msra.mxu0 0.0
    %253 = vmatprep.subr.mxu0 0.0
    %254 = vmatpush2.msra.mxu0 0.0
    %255 = vmatprep.subr.mxu0 0.0
    %256 = vmatpush2.msra.mxu0 0.0
    %257 = vmatprep.subr.mxu0 0.0
    %258 = vmatpush2.msra.mxu0 0.0
    %259 = vmatprep.subr.mxu0 0.0
    %260 = vmatpush2.msra.mxu0 0.0
    %261 = vmatprep.subr.mxu0 0.0
    %262 = vmatpush2.msra.mxu0 0.0
    %263 = vmatprep.subr.mxu0 0.0
    %264 = vmatpush2.msra.mxu0 0.0
    %265 = vmatprep.mubr.f32.mxu0 0.0
    %266 = vmatmul.mubr.f32.gmra.mxu0 %v128
    %v267 = vpop.f32.mrf.mxu0
    %v268 = vadd.f32 %v117, %v267
    %v269 = vpop.f32.mrf.mxu0
    %v270 = vadd.f32 %v121, %v269
    %271 = vdwg.mxu0
    %272 = vst [vmem:[#allocation4] sm:$0xff] %v197
    %273 = vst [vmem:[#allocation4 + $0x8] sm:$0xff] %v199
    %274 = vst [vmem:[#allocation4 + $0x10] sm:$0xff] %v268
    %275 = vst [vmem:[#allocation4 + $0x18] sm:$0xff] %v270
    %v276 = vld [vmem:[#allocation2] sm:$0x1]
    %v277 = vld [vmem:[#allocation3] sm:$0x1]
    loop: start=0, step=1, limit=8
    $region54: #{tpu_custom_call.1} parent=1 // loop_pre_header
      _
    $region55: #{tpu_custom_call.1} parent=1 // loop_header
      %s279 = sphi 0, %s283
      %p280 = scmp.ge.s32.totalorder %s279, 8
      %v284 = vphi %v276, %v568
      %v285 = vphi %v277, %v569
    $region56: #{tpu_custom_call.1} parent=1 // loop_header_branch
      %282 = sbr.rel (%p280) target = $region60
    $region57: #{tpu_custom_call.1} parent=1 // loop_body
      %s286 = sshra.s32 %s279, 3
      %s287 = sand.u32 %s279, 7
      %s288 = sshra.s32 %s279, 3
      %s289 = sand.u32 %s279, 7
      %s290 = smul.u32 %s286, 4
      %s291 = smul.u32 %s290, 8
      %s292 = sadd.s32 %s291, %s289
      %s293 = scalar_lea.vmem [#allocation4], %s292
      %v294 = vld [vmem:[%s293] ss:$8 sm:$0xf]
      %v295 = vld [vmem:[#allocation11] sm:$0xff]
      %v296 = vld [vmem:[#allocation11 + $0x8] sm:$0xff]
      %v297 = vld [vmem:[#allocation11 + $0x10] sm:$0xff]
      %v298 = vld [vmem:[#allocation11 + $0x18] sm:$0xff]
      %v299 = vld [vmem:[#allocation11 + $0x20] sm:$0xff]
      %v300 = vld [vmem:[#allocation11 + $0x28] sm:$0xff]
      %v301 = vld [vmem:[#allocation11 + $0x30] sm:$0xff]
      %v302 = vld [vmem:[#allocation11 + $0x38] sm:$0xff]
      %v303 = vld [vmem:[#allocation11 + $0x40] sm:$0xff]
      %v304 = vld [vmem:[#allocation11 + $0x48] sm:$0xff]
      %v305 = vld [vmem:[#allocation11 + $0x50] sm:$0xff]
      %v306 = vld [vmem:[#allocation11 + $0x58] sm:$0xff]
      %v307 = vld [vmem:[#allocation11 + $0x60] sm:$0xff]
      %v308 = vld [vmem:[#allocation11 + $0x68] sm:$0xff]
      %v309 = vld [vmem:[#allocation11 + $0x70] sm:$0xff]
      %v310 = vld [vmem:[#allocation11 + $0x78] sm:$0xff]
      %v311 = vld [vmem:[#allocation11 + $0x80] sm:$0xff]
      %v312 = vld [vmem:[#allocation11 + $0x88] sm:$0xff]
      %v313 = vld [vmem:[#allocation11 + $0x90] sm:$0xff]
      %v314 = vld [vmem:[#allocation11 + $0x98] sm:$0xff]
      %v315 = vld [vmem:[#allocation11 + $0xa0] sm:$0xff]
      %v316 = vld [vmem:[#allocation11 + $0xa8] sm:$0xff]
      %v317 = vld [vmem:[#allocation11 + $0xb0] sm:$0xff]
      %v318 = vld [vmem:[#allocation11 + $0xb8] sm:$0xff]
      %v319 = vld [vmem:[#allocation11 + $0xc0] sm:$0xff]
      %v320 = vld [vmem:[#allocation11 + $0xc8] sm:$0xff]
      %v321 = vld [vmem:[#allocation11 + $0xd0] sm:$0xff]
      %v322 = vld [vmem:[#allocation11 + $0xd8] sm:$0xff]
      %v323 = vld [vmem:[#allocation11 + $0xe0] sm:$0xff]
      %v324 = vld [vmem:[#allocation11 + $0xe8] sm:$0xff]
      %v325 = vld [vmem:[#allocation11 + $0xf0] sm:$0xff]
      %v326 = vld [vmem:[#allocation11 + $0xf8] sm:$0xff]
      %v327 = vld [vmem:[#allocation11 + $0x100] sm:$0xff]
      %v328 = vld [vmem:[#allocation11 + $0x108] sm:$0xff]
      %v329 = vld [vmem:[#allocation11 + $0x110] sm:$0xff]
      %v330 = vld [vmem:[#allocation11 + $0x118] sm:$0xff]
      %v331 = vld [vmem:[#allocation11 + $0x120] sm:$0xff]
      %v332 = vld [vmem:[#allocation11 + $0x128] sm:$0xff]
      %v333 = vld [vmem:[#allocation11 + $0x130] sm:$0xff]
      %v334 = vld [vmem:[#allocation11 + $0x138] sm:$0xff]
      %v335 = vld [vmem:[#allocation11 + $0x140] sm:$0xff]
      %v336 = vld [vmem:[#allocation11 + $0x148] sm:$0xff]
      %v337 = vld [vmem:[#allocation11 + $0x150] sm:$0xff]
      %v338 = vld [vmem:[#allocation11 + $0x158] sm:$0xff]
      %v339 = vld [vmem:[#allocation11 + $0x160] sm:$0xff]
      %v340 = vld [vmem:[#allocation11 + $0x168] sm:$0xff]
      %v341 = vld [vmem:[#allocation11 + $0x170] sm:$0xff]
      %v342 = vld [vmem:[#allocation11 + $0x178] sm:$0xff]
      %v343 = vld [vmem:[#allocation11 + $0x180] sm:$0xff]
      %v344 = vld [vmem:[#allocation11 + $0x188] sm:$0xff]
      %v345 = vld [vmem:[#allocation11 + $0x190] sm:$0xff]
      %v346 = vld [vmem:[#allocation11 + $0x198] sm:$0xff]
      %v347 = vld [vmem:[#allocation11 + $0x1a0] sm:$0xff]
      %v348 = vld [vmem:[#allocation11 + $0x1a8] sm:$0xff]
      %v349 = vld [vmem:[#allocation11 + $0x1b0] sm:$0xff]
      %v350 = vld [vmem:[#allocation11 + $0x1b8] sm:$0xff]
      %v351 = vld [vmem:[#allocation11 + $0x1c0] sm:$0xff]
      %v352 = vld [vmem:[#allocation11 + $0x1c8] sm:$0xff]
      %v353 = vld [vmem:[#allocation11 + $0x1d0] sm:$0xff]
      %v354 = vld [vmem:[#allocation11 + $0x1d8] sm:$0xff]
      %v355 = vld [vmem:[#allocation11 + $0x1e0] sm:$0xff]
      %v356 = vld [vmem:[#allocation11 + $0x1e8] sm:$0xff]
      %v357 = vld [vmem:[#allocation11 + $0x1f0] sm:$0xff]
      %v358 = vld [vmem:[#allocation11 + $0x1f8] sm:$0xff]
      %359 = vmatprep.subr.mxu0 %v356
      %360 = vmatpush1.msra.mxu0 %v355
      %361 = vmatprep.subr.mxu0 %v352
      %362 = vmatpush1.msra.mxu0 %v351
      %363 = vmatprep.subr.mxu0 %v348
      %364 = vmatpush1.msra.mxu0 %v347
      %365 = vmatprep.subr.mxu0 %v344
      %366 = vmatpush1.msra.mxu0 %v343
      %367 = vmatprep.subr.mxu0 %v340
      %368 = vmatpush1.msra.mxu0 %v339
      %369 = vmatprep.subr.mxu0 %v336
      %370 = vmatpush1.msra.mxu0 %v335
      %371 = vmatprep.subr.mxu0 %v332
      %372 = vmatpush1.msra.mxu0 %v331
      %373 = vmatprep.subr.mxu0 %v328
      %374 = vmatpush1.msra.mxu0 %v327
      %375 = vmatprep.subr.mxu0 %v324
      %376 = vmatpush1.msra.mxu0 %v323
      %377 = vmatprep.subr.mxu0 %v320
      %378 = vmatpush1.msra.mxu0 %v319
      %379 = vmatprep.subr.mxu0 %v316
      %380 = vmatpush1.msra.mxu0 %v315
      %381 = vmatprep.subr.mxu0 %v312
      %382 = vmatpush1.msra.mxu0 %v311
      %383 = vmatprep.subr.mxu0 %v308
      %384 = vmatpush1.msra.mxu0 %v307
      %385 = vmatprep.subr.mxu0 %v304
      %386 = vmatpush1.msra.mxu0 %v303
      %387 = vmatprep.subr.mxu0 %v300
      %388 = vmatpush1.msra.mxu0 %v299
      %389 = vmatprep.subr.mxu0 %v296
      %390 = vmatpush1.msra.mxu0 %v295
      %391 = vmatprep.subr.mxu0 0.0
      %392 = vmatpush2.msra.mxu0 0.0
      %393 = vmatprep.subr.mxu0 0.0
      %394 = vmatpush2.msra.mxu0 0.0
      %395 = vmatprep.subr.mxu0 0.0
      %396 = vmatpush2.msra.mxu0 0.0
      %397 = vmatprep.subr.mxu0 0.0
      %398 = vmatpush2.msra.mxu0 0.0
      %399 = vmatprep.subr.mxu0 0.0
      %400 = vmatpush2.msra.mxu0 0.0
      %401 = vmatprep.subr.mxu0 0.0
      %402 = vmatpush2.msra.mxu0 0.0
      %403 = vmatprep.subr.mxu0 0.0
      %404 = vmatpush2.msra.mxu0 0.0
      %405 = vmatprep.subr.mxu0 0.0
      %406 = vmatpush2.msra.mxu0 0.0
      %407 = vmatprep.subr.mxu0 0.0
      %408 = vmatpush2.msra.mxu0 0.0
      %409 = vmatprep.subr.mxu0 0.0
      %410 = vmatpush2.msra.mxu0 0.0
      %411 = vmatprep.subr.mxu0 0.0
      %412 = vmatpush2.msra.mxu0 0.0
      %413 = vmatprep.subr.mxu0 0.0
      %414 = vmatpush2.msra.mxu0 0.0
      %415 = vmatprep.subr.mxu0 0.0
      %416 = vmatpush2.msra.mxu0 0.0
      %417 = vmatprep.subr.mxu0 0.0
      %418 = vmatpush2.msra.mxu0 0.0
      %419 = vmatprep.subr.mxu0 0.0
      %420 = vmatpush2.msra.mxu0 0.0
      %421 = vmatprep.subr.mxu0 0.0
      %422 = vmatpush2.msra.mxu0 0.0
      %423 = vmatprep.mubr.f32.mxu0 0.0
      %424 = vmatmul.mubr.f32.gmra.mxu0 %v284
      %v425 = vpop.f32.mrf.mxu0
      %v426 = vadd.f32 0.0, %v425
      %v427 = vpop.f32.mrf.mxu0
      %v428 = vadd.f32 0.0, %v427
      %429 = vdwg.mxu0
      %430 = vmatprep.subr.mxu0 %v358
      %431 = vmatpush1.msra.mxu0 %v357
      %432 = vmatprep.subr.mxu0 %v354
      %433 = vmatpush1.msra.mxu0 %v353
      %434 = vmatprep.subr.mxu0 %v350
      %435 = vmatpush1.msra.mxu0 %v349
      %436 = vmatprep.subr.mxu0 %v346
      %437 = vmatpush1.msra.mxu0 %v345
      %438 = vmatprep.subr.mxu0 %v342
      %439 = vmatpush1.msra.mxu0 %v341
      %440 = vmatprep.subr.mxu0 %v338
      %441 = vmatpush1.msra.mxu0 %v337
      %442 = vmatprep.subr.mxu0 %v334
      %443 = vmatpush1.msra.mxu0 %v333
      %444 = vmatprep.subr.mxu0 %v330
      %445 = vmatpush1.msra.mxu0 %v329
      %446 = vmatprep.subr.mxu0 %v326
      %447 = vmatpush1.msra.mxu0 %v325
      %448 = vmatprep.subr.mxu0 %v322
      %449 = vmatpush1.msra.mxu0 %v321
      %450 = vmatprep.subr.mxu0 %v318
      %451 = vmatpush1.msra.mxu0 %v317
      %452 = vmatprep.subr.mxu0 %v314
      %453 = vmatpush1.msra.mxu0 %v313
      %454 = vmatprep.subr.mxu0 %v310
      %455 = vmatpush1.msra.mxu0 %v309
      %456 = vmatprep.subr.mxu0 %v306
      %457 = vmatpush1.msra.mxu0 %v305
      %458 = vmatprep.subr.mxu0 %v302
      %459 = vmatpush1.msra.mxu0 %v301
      %460 = vmatprep.subr.mxu0 %v298
      %461 = vmatpush1.msra.mxu0 %v297
      %462 = vmatprep.subr.mxu0 0.0
      %463 = vmatpush2.msra.mxu0 0.0
      %464 = vmatprep.subr.mxu0 0.0
      %465 = vmatpush2.msra.mxu0 0.0
      %466 = vmatprep.subr.mxu0 0.0
      %467 = vmatpush2.msra.mxu0 0.0
      %468 = vmatprep.subr.mxu0 0.0
      %469 = vmatpush2.msra.mxu0 0.0
      %470 = vmatprep.subr.mxu0 0.0
      %471 = vmatpush2.msra.mxu0 0.0
      %472 = vmatprep.subr.mxu0 0.0
      %473 = vmatpush2.msra.mxu0 0.0
      %474 = vmatprep.subr.mxu0 0.0
      %475 = vmatpush2.msra.mxu0 0.0
      %476 = vmatprep.subr.mxu0 0.0
      %477 = vmatpush2.msra.mxu0 0.0
      %478 = vmatprep.subr.mxu0 0.0
      %479 = vmatpush2.msra.mxu0 0.0
      %480 = vmatprep.subr.mxu0 0.0
      %481 = vmatpush2.msra.mxu0 0.0
      %482 = vmatprep.subr.mxu0 0.0
      %483 = vmatpush2.msra.mxu0 0.0
      %484 = vmatprep.subr.mxu0 0.0
      %485 = vmatpush2.msra.mxu0 0.0
      %486 = vmatprep.subr.mxu0 0.0
      %487 = vmatpush2.msra.mxu0 0.0
      %488 = vmatprep.subr.mxu0 0.0
      %489 = vmatpush2.msra.mxu0 0.0
      %490 = vmatprep.subr.mxu0 0.0
      %491 = vmatpush2.msra.mxu0 0.0
      %492 = vmatprep.subr.mxu0 0.0
      %493 = vmatpush2.msra.mxu0 0.0
      %494 = vmatprep.mubr.f32.mxu0 0.0
      %495 = vmatmul.mubr.f32.gmra.mxu0 %v284
      %v496 = vpop.f32.mrf.mxu0
      %v497 = vadd.f32 0.0, %v496
      %v498 = vpop.f32.mrf.mxu0
      %v499 = vadd.f32 0.0, %v498
      %500 = vdwg.mxu0
      %v505 = vcombine.low %v426, %v428
      %v506 = vcombine.low %v497, %v499
      %v508 = vunpack.c.l.s4 1966171168
      %v509 = vunpack.c.0.s8 %v508
      %v510 = vlaneseq
      %v511 = vshrl.u32 %v510, 7
      %v512 = vsub.s32 %v509, %v511
      %v513 = vrot.slane %v505, %v512
      %v515 = vunpack.c.l.s4 1966171168
      %v516 = vunpack.c.0.s8 %v515
      %v517 = vlaneseq
      %v518 = vshrl.u32 %v517, 7
      %v519 = vsub.s32 %v516, %v518
      %v520 = vrot.slane %v506, %v519
      %v521 = vcombine.low %v513, %v520
      %v523 = vunpack.c.l.s4 1966171168
      %v524 = vunpack.c.0.s8 %v523
      %v525 = vlaneseq
      %v526 = vshrl.u32 %v525, 7
      %v527 = vsub.s32 %v524, %v526
      %v528 = vrot.slane %v521, %v527
      %v530 = vadd.f32 %v294, %v528
      %v531 = vxor.u32 %v530, 2147483648
      %v532 = vmul.f32 %v531, 1.442695
      %v533 = vpow.pop %v532
      %v534 = vadd.f32 %v533, 1.0
      %v535 = vrcp.pop %v534
      %v536 = vmul.f32 1.0, %v535
      %v538 = vrot.slane %v530, 1
      %v540 = vxor.u32 %v538, 2147483648
      %v541 = vmul.f32 %v540, 1.442695
      %v542 = vpow.pop %v541
      %v543 = vadd.f32 %v542, 1.0
      %v544 = vrcp.pop %v543
      %v545 = vmul.f32 1.0, %v544
      %v546 = vrot.slane %v530, 2
      %v548 = vxor.u32 %v546, 2147483648
      %v549 = vmul.f32 %v548, 1.442695
      %v550 = vpow.pop %v549
      %v551 = vadd.f32 %v550, 1.0
      %v552 = vrcp.pop %v551
      %v553 = vmul.f32 1.0, %v552
      %v554 = vrot.slane %v530, 3
      %v556 = vtanh.pop %v554
      %v557 = vmul.f32 %v545, %v285
      %v558 = vmul.f32 %v536, %v556
      %v559 = vadd.f32 %v557, %v558
      %v560 = vtanh.pop %v559
      %v561 = vmul.f32 %v553, %v560
      %s562 = smul.u32 0, 8
      %s563 = sadd.s32 %s562, %s279
      %p564 = scmp.lt.s32.totalorder %s563, 8
      %s565 = scalar_select %p564, 1, 0
      %v566 = vstv %s565
      %vm567 = vcmp.eq.s32.totalorder %v566, 1
      %v568 = vsel %vm567, %v561, %v284
      %v569 = vsel %vm567, %v559, %v285
      %s570 = scalar_lea.vmem [#allocation5], %s279
      %571 = vst [vmem:[%s570] sm:$0x1] %v568
    $region58: #{tpu_custom_call.1} parent=1 // loop_footer
      %s283 = sadd.s32 1, %s279
    $region59: #{tpu_custom_call.1} parent=1 // loop_footer_branch
      %278 = sbr.rel target = $region55
    $region60: #{tpu_custom_call.1} parent=1 // loop_exit
      _
    %572 = vst [vmem:[#allocation2] sm:$0x1] %v284
    %573 = vst [vmem:[#allocation3] sm:$0x1] %v285
    %v574 = vld [vmem:[#allocation5] sm:$0xff]
    %v575 = vld [vmem:[#allocation12] sm:$0xff]
    %v576 = vld [vmem:[#allocation12 + $0x8] sm:$0xff]
    %v577 = vld [vmem:[#allocation12 + $0x10] sm:$0xff]
    %v578 = vld [vmem:[#allocation12 + $0x18] sm:$0xff]
    %v579 = vld [vmem:[#allocation12 + $0x20] sm:$0xff]
    %v580 = vld [vmem:[#allocation12 + $0x28] sm:$0xff]
    %v581 = vld [vmem:[#allocation12 + $0x30] sm:$0xff]
    %v582 = vld [vmem:[#allocation12 + $0x38] sm:$0xff]
    %v583 = vld [vmem:[#allocation12 + $0x40] sm:$0xff]
    %v584 = vld [vmem:[#allocation12 + $0x48] sm:$0xff]
    %v585 = vld [vmem:[#allocation12 + $0x50] sm:$0xff]
    %v586 = vld [vmem:[#allocation12 + $0x58] sm:$0xff]
    %v587 = vld [vmem:[#allocation12 + $0x60] sm:$0xff]
    %v588 = vld [vmem:[#allocation12 + $0x68] sm:$0xff]
    %v589 = vld [vmem:[#allocation12 + $0x70] sm:$0xff]
    %v590 = vld [vmem:[#allocation12 + $0x78] sm:$0xff]
    %v591 = vld [vmem:[%s7] sm:$0x1]
    %v593 = vlaneseq
    %v594 = vshrl.u32 %v593, 7
    %v595 = vsub.s32 0, %v594
    %v596 = vrot.slane %v591, %v595
    %598 = vmatprep.subr.mxu0 0.0
    %599 = vmatpush1.msra.mxu0 %v590
    %600 = vmatprep.subr.mxu0 0.0
    %601 = vmatpush1.msra.mxu0 %v589
    %602 = vmatprep.subr.mxu0 0.0
    %603 = vmatpush1.msra.mxu0 %v588
    %604 = vmatprep.subr.mxu0 0.0
    %605 = vmatpush1.msra.mxu0 %v587
    %606 = vmatprep.subr.mxu0 0.0
    %607 = vmatpush1.msra.mxu0 %v586
    %608 = vmatprep.subr.mxu0 0.0
    %609 = vmatpush1.msra.mxu0 %v585
    %610 = vmatprep.subr.mxu0 0.0
    %611 = vmatpush1.msra.mxu0 %v584
    %612 = vmatprep.subr.mxu0 0.0
    %613 = vmatpush1.msra.mxu0 %v583
    %614 = vmatprep.subr.mxu0 0.0
    %615 = vmatpush1.msra.mxu0 %v582
    %616 = vmatprep.subr.mxu0 0.0
    %617 = vmatpush1.msra.mxu0 %v581
    %618 = vmatprep.subr.mxu0 0.0
    %619 = vmatpush1.msra.mxu0 %v580
    %620 = vmatprep.subr.mxu0 0.0
    %621 = vmatpush1.msra.mxu0 %v579
    %622 = vmatprep.subr.mxu0 0.0
    %623 = vmatpush1.msra.mxu0 %v578
    %624 = vmatprep.subr.mxu0 0.0
    %625 = vmatpush1.msra.mxu0 %v577
    %626 = vmatprep.subr.mxu0 0.0
    %627 = vmatpush1.msra.mxu0 %v576
    %628 = vmatprep.subr.mxu0 0.0
    %629 = vmatpush1.msra.mxu0 %v575
    %630 = vmatprep.subr.mxu0 0.0
    %631 = vmatpush2.msra.mxu0 0.0
    %632 = vmatprep.subr.mxu0 0.0
    %633 = vmatpush2.msra.mxu0 0.0
    %634 = vmatprep.subr.mxu0 0.0
    %635 = vmatpush2.msra.mxu0 0.0
    %636 = vmatprep.subr.mxu0 0.0
    %637 = vmatpush2.msra.mxu0 0.0
    %638 = vmatprep.subr.mxu0 0.0
    %639 = vmatpush2.msra.mxu0 0.0
    %640 = vmatprep.subr.mxu0 0.0
    %641 = vmatpush2.msra.mxu0 0.0
    %642 = vmatprep.subr.mxu0 0.0
    %643 = vmatpush2.msra.mxu0 0.0
    %644 = vmatprep.subr.mxu0 0.0
    %645 = vmatpush2.msra.mxu0 0.0
    %646 = vmatprep.subr.mxu0 0.0
    %647 = vmatpush2.msra.mxu0 0.0
    %648 = vmatprep.subr.mxu0 0.0
    %649 = vmatpush2.msra.mxu0 0.0
    %650 = vmatprep.subr.mxu0 0.0
    %651 = vmatpush2.msra.mxu0 0.0
    %652 = vmatprep.subr.mxu0 0.0
    %653 = vmatpush2.msra.mxu0 0.0
    %654 = vmatprep.subr.mxu0 0.0
    %655 = vmatpush2.msra.mxu0 0.0
    %656 = vmatprep.subr.mxu0 0.0
    %657 = vmatpush2.msra.mxu0 0.0
    %658 = vmatprep.subr.mxu0 0.0
    %659 = vmatpush2.msra.mxu0 0.0
    %660 = vmatprep.subr.mxu0 0.0
    %661 = vmatpush2.msra.mxu0 0.0
    %662 = vmatprep.mubr.f32.mxu0 0.0
    %663 = vmatmul.mubr.f32.gmra.mxu0 %v574
    %v664 = vpop.f32.mrf.mxu0
    %v665 = vadd.f32 %v596, %v664
    %v666 = vpop.f32.mrf.mxu0
    %667 = vdwg.mxu0
    %668 = vst [vmem:[#allocation14] sm:$0xff] %v665
    %669 = vst [vmem:[#allocation15] sm:$0x1] %v284
    %670 = vst [vmem:[#allocation17] sm:$0x1] %v285
    // Predicated region
    $region61: #{tpu_custom_call.1} parent=1 // pred_check
      _
    $region62: #{tpu_custom_call.1} parent=1 // pred_check_branch
      %672 = sbr.rel (0) target = $region64
    $region63: #{tpu_custom_call.1} parent=1 // pred_region
      %s674 = ssub.s32 128, 128
      %675 = vsyncadd [#allocation8], %s674
      %s677 = sshll.u32 [#allocation14], 4
      %s678 = int_to_ptr.vmem [resolvable:$true] %s677
      %680 = dma.vmem_to_hbm [thread:$0]  %s678, 128, %s8, [#allocation8]
    $region64: #{tpu_custom_call.1} parent=1 // pred_fallthru
      _
    // Predicated region
    $region65: #{tpu_custom_call.1} parent=1 // pred_check
      _
    $region66: #{tpu_custom_call.1} parent=1 // pred_check_branch
      %682 = sbr.rel (0) target = $region68
    $region67: #{tpu_custom_call.1} parent=1 // pred_region
      %s684 = ssub.s32 16, 16
      %685 = vsyncadd [#allocation16], %s684
      %s687 = sshll.u32 [#allocation15], 4
      %s688 = int_to_ptr.vmem [resolvable:$true] %s687
      %690 = dma.vmem_to_hbm [thread:$0]  %s688, 16, %s9, [#allocation16]
    $region68: #{tpu_custom_call.1} parent=1 // pred_fallthru
      _
    // Predicated region
    $region69: #{tpu_custom_call.1} parent=1 // pred_check
      _
    $region70: #{tpu_custom_call.1} parent=1 // pred_check_branch
      %692 = sbr.rel (0) target = $region72
    $region71: #{tpu_custom_call.1} parent=1 // pred_region
      %s694 = ssub.s32 16, 16
      %695 = vsyncadd [#allocation16], %s694
      %s697 = sshll.u32 [#allocation17], 4
      %s698 = int_to_ptr.vmem [resolvable:$true] %s697
      %700 = dma.vmem_to_hbm [thread:$0]  %s698, 16, %s10, [#allocation16]
    $region72: #{tpu_custom_call.1} parent=1 // pred_fallthru
      _
    // Predicated region
    $region73: #{tpu_custom_call.1} parent=1 // pred_check
      _
    $region74: #{tpu_custom_call.1} parent=1 // pred_check_branch
      %702 = sbr.rel (0) target = $region76
    $region75: #{tpu_custom_call.1} parent=1 // pred_region
      %703 = dma.done [#allocation8], 128
    $region76: #{tpu_custom_call.1} parent=1 // pred_fallthru
      _
    // Predicated region
    $region77: #{tpu_custom_call.1} parent=1 // pred_check
      _
    $region78: #{tpu_custom_call.1} parent=1 // pred_check_branch
      %705 = sbr.rel (0) target = $region80
    $region79: #{tpu_custom_call.1} parent=1 // pred_region
      %706 = dma.done [#allocation16], 16
    $region80: #{tpu_custom_call.1} parent=1 // pred_fallthru
      _
    // Predicated region
    $region81: #{tpu_custom_call.1} parent=1 // pred_check
      _
    $region82: #{tpu_custom_call.1} parent=1 // pred_check_branch
      %708 = sbr.rel (0) target = $region84
    $region83: #{tpu_custom_call.1} parent=1 // pred_region
      %709 = dma.done [#allocation16], 16
    $region84: #{tpu_custom_call.1} parent=1 // pred_fallthru
      _
    %710 = vsyncpa [#allocation7], 1
    %711 = vsyncpa [#allocation10], 1
    %712 = vsyncpa [#allocation13], 1
    %713 = vsyncpa [#allocation8], 1
    %714 = vsyncpa [#allocation16], 1

</llo_original>
